<compile_context>
chip_gen: v6e
topology: v6e:2x2x1
jax: 0.10.0
libtpu: 0.0.40
codegen_flags: <defaults>
</compile_context>

<pallas_src>
import functools

import jax
import jax.numpy as jnp
from jax.experimental import pallas as pl
from jax.experimental.pallas import tpu as pltpu


# ----------------------------- Pallas kernels ------------------------------


def _conv3x3_kernel(x_ref, w_ref, b_ref, o_ref, col_ref, *, H, W, relu):
    """3x3 same-padding conv as a single MXU matmul.

    x_ref:   (1, Cin, H*W) f32   activations, lane axis = flattened H*W
    w_ref:   (Cout, 9*Cin) bf16  packed weights: w_mat[co, t*Cin+ci] = w[dy+1, dx+1, ci, co]
    b_ref:   (Cout, 1)     f32   bias (broadcast over lanes)
    o_ref:   (1, Cout, H*W) f32
    col_ref: (9*Cin, H*W)  f32   VMEM scratch holding the im2col stack
    """
    cin = x_ref.shape[1]
    hw = x_ref.shape[2]
    x = x_ref[0]                                          # (Cin, HW)

    # flat index -> (row, col) for the zero-padding border masks
    flat = jax.lax.broadcasted_iota(jnp.int32, (1, hw), 1)
    row = flat // W
    col = flat % W

    t = 0
    for dy in (-1, 0, 1):
        for dx in (-1, 0, 1):
            s = dy * W + dx
            # want tap[f] = x[f + s]  ==  jnp.roll(x, -s); pltpu.roll == jnp.roll semantics
            sh = (-s) % hw
            shifted = pltpu.roll(x, shift=sh, axis=1) if sh else x
            valid = ((row + dy >= 0) & (row + dy < H) &
                     (col + dx >= 0) & (col + dx < W))
            col_ref[t * cin:(t + 1) * cin, :] = jnp.where(valid, shifted, 0.0)
            t += 1

    acc = jnp.dot(w_ref[...], col_ref[...].astype(jnp.bfloat16),
                  preferred_element_type=jnp.float32)     # (Cout, HW) f32
    acc = acc + b_ref[...]                                # (Cout, 1) lane-broadcast
    if relu:
        acc = jnp.maximum(acc, 0.0)
    o_ref[0] = acc


def _expand_kernel(x_ref, s_ref, o_ref):
    # per-coil complex multiply: out = x * S  (one (batch, coil) tile per grid step)
    x = x_ref[0]                      # (2, HW)  [real; imag]
    s = s_ref[0, 0]                   # (2, HW)
    xr, xi = x[0:1], x[1:2]
    sr, si = s[0:1], s[1:2]
    o_ref[0, 0, 0:1, :] = xr * sr - xi * si
    o_ref[0, 0, 1:2, :] = xr * si + xi * sr


def _dc_kernel(k_ref, k0_ref, m_ref, o_ref, *, v):
    # (1-m)*k + m*(v*k + (1-v)*k0), applied to the real & imag planes at once
    k = k_ref[0, 0]                   # (2, HW)
    k0 = k0_ref[0, 0]                 # (2, HW)
    m = m_ref[0, 0]                   # (1, HW) -> broadcasts over real/imag
    o_ref[0, 0] = (1.0 - m) * k + m * (v * k + (1.0 - v) * k0)


def _accumulate_reduce(xc_ref, s_ref, acc_ref):
    # acc += x * conj(S) for the current coil
    xc = xc_ref[0, 0]                 # (2, HW)
    s = s_ref[0, 0]                   # (2, HW)
    xr, xi = xc[0:1], xc[1:2]
    sr, si = s[0:1], s[1:2]
    acc_ref[0:1, :] += xr * sr + xi * si
    acc_ref[1:2, :] += xi * sr - xr * si


def _reduce_kernel(xc_ref, s_ref, o_ref, acc_ref):
    # sum over the coil grid axis of x * conj(S)
    c = pl.program_id(1)

    @pl.when(c == 0)
    def _():
        acc_ref[...] = jnp.zeros_like(acc_ref)

    _accumulate_reduce(xc_ref, s_ref, acc_ref)

    @pl.when(c == pl.num_programs(1) - 1)
    def _():
        o_ref[0] = acc_ref[...]


def _reduce_wa_kernel(xc_ref, s_ref, x_ref, xcnn_ref, o_ref, acc_ref, *, beta):
    # coil reduce fused with the weighted-average block:
    #   out = beta * (x + x_cnn) + (1 - beta) * sum_c xc * conj(S)
    c = pl.program_id(1)

    @pl.when(c == 0)
    def _():
        acc_ref[...] = jnp.zeros_like(acc_ref)

    _accumulate_reduce(xc_ref, s_ref, acc_ref)

    @pl.when(c == pl.num_programs(1) - 1)
    def _():
        o_ref[0] = beta * (x_ref[0] + xcnn_ref[0]) + (1.0 - beta) * acc_ref[...]


# ------------------------------ Pallas wrappers -----------------------------

_PAR_B = pltpu.CompilerParams(dimension_semantics=("parallel",))
_PAR_BC = pltpu.CompilerParams(dimension_semantics=("parallel", "parallel"))
_RED_BC = pltpu.CompilerParams(dimension_semantics=("parallel", "arbitrary"))


def conv3x3_same(x, w_mat, b_col, H, W, relu):
    # x: (B, Cin, H*W) -> (B, Cout, H*W); 3x3 conv, stride 1, zero padding 1
    B, Cin, HW = x.shape
    Cout = w_mat.shape[0]
    return pl.pallas_call(
        functools.partial(_conv3x3_kernel, H=H, W=W, relu=relu),
        grid=(B,),
        in_specs=[
            pl.BlockSpec((1, Cin, HW), lambda b: (b, 0, 0)),
            pl.BlockSpec((Cout, 9 * Cin), lambda b: (0, 0)),   # weights stay resident
            pl.BlockSpec((Cout, 1), lambda b: (0, 0)),
        ],
        out_specs=pl.BlockSpec((1, Cout, HW), lambda b: (b, 0, 0)),
        out_shape=jax.ShapeDtypeStruct((B, Cout, HW), jnp.float32),
        scratch_shapes=[pltpu.VMEM((9 * Cin, HW), jnp.float32)],
        compiler_params=_PAR_B,
    )(x, w_mat, b_col)


def expand_operator(x, sens):
    # x: (B, 2, HW); sens: (B, nc, 2, HW) -> per-coil images (B, nc, 2, HW)
    B, nc, _, HW = sens.shape
    return pl.pallas_call(
        _expand_kernel,
        grid=(B, nc),
        in_specs=[
            pl.BlockSpec((1, 2, HW), lambda b, c: (b, 0, 0)),
            pl.BlockSpec((1, 1, 2, HW), lambda b, c: (b, c, 0, 0)),
        ],
        out_specs=pl.BlockSpec((1, 1, 2, HW), lambda b, c: (b, c, 0, 0)),
        out_shape=jax.ShapeDtypeStruct((B, nc, 2, HW), jnp.float32),
        compiler_params=_PAR_BC,
    )(x, sens)


def dc_combine(k, k0, m, v):
    # k, k0: (B, nc, 2, HW); m: (B, nc, 1, HW)
    B, nc, _, HW = k.shape
    return pl.pallas_call(
        functools.partial(_dc_kernel, v=v),
        grid=(B, nc),
        in_specs=[
            pl.BlockSpec((1, 1, 2, HW), lambda b, c: (b, c, 0, 0)),
            pl.BlockSpec((1, 1, 2, HW), lambda b, c: (b, c, 0, 0)),
            pl.BlockSpec((1, 1, 1, HW), lambda b, c: (b, c, 0, 0)),
        ],
        out_specs=pl.BlockSpec((1, 1, 2, HW), lambda b, c: (b, c, 0, 0)),
        out_shape=jax.ShapeDtypeStruct((B, nc, 2, HW), jnp.float32),
        compiler_params=_PAR_BC,
    )(k, k0, m)


def reduce_operator(xc, sens):
    # sum over coils of xc * conj(sens): (B, nc, 2, HW) -> (B, 2, HW)
    B, nc, _, HW = sens.shape
    return pl.pallas_call(
        _reduce_kernel,
        grid=(B, nc),
        in_specs=[
            pl.BlockSpec((1, 1, 2, HW), lambda b, c: (b, c, 0, 0)),
            pl.BlockSpec((1, 1, 2, HW), lambda b, c: (b, c, 0, 0)),
        ],
        out_specs=pl.BlockSpec((1, 2, HW), lambda b, c: (b, 0, 0)),
        out_shape=jax.ShapeDtypeStruct((B, 2, HW), jnp.float32),
        scratch_shapes=[pltpu.VMEM((2, HW), jnp.float32)],
        compiler_params=_RED_BC,
    )(xc, sens)


def reduce_weighted_average(xc, sens, x, x_cnn, beta):
    # beta*(x + x_cnn) + (1-beta) * reduce(xc, sens)   (fused, no Sx round-trip)
    B, nc, _, HW = sens.shape
    return pl.pallas_call(
        functools.partial(_reduce_wa_kernel, beta=beta),
        grid=(B, nc),
        in_specs=[
            pl.BlockSpec((1, 1, 2, HW), lambda b, c: (b, c, 0, 0)),
            pl.BlockSpec((1, 1, 2, HW), lambda b, c: (b, c, 0, 0)),
            pl.BlockSpec((1, 2, HW), lambda b, c: (b, 0, 0)),
            pl.BlockSpec((1, 2, HW), lambda b, c: (b, 0, 0)),
        ],
        out_specs=pl.BlockSpec((1, 2, HW), lambda b, c: (b, 0, 0)),
        out_shape=jax.ShapeDtypeStruct((B, 2, HW), jnp.float32),
        scratch_shapes=[pltpu.VMEM((2, HW), jnp.float32)],
        compiler_params=_RED_BC,
    )(xc, sens, x, x_cnn)


# ------------------------------ FFT glue (jnp) ------------------------------


def _fft2c(z_flat, H, W, inverse, shift):
    # z_flat: (B, nc, 2, H*W) real/imag planes -> same shape; 2-D (i)FFT over H, W
    # TODO(synk): no Pallas FFT primitive; XLA FFT with orthonormal normalization.
    B, nc = z_flat.shape[:2]
    zr = z_flat[:, :, 0, :].reshape(B, nc, H, W)
    zi = z_flat[:, :, 1, :].reshape(B, nc, H, W)
    z = zr + 1j * zi
    if shift:
        z = jnp.fft.ifftshift(z, axes=(-2, -1))
    z = jnp.fft.ifft2(z, norm="ortho") if inverse else jnp.fft.fft2(z, norm="ortho")
    if shift:
        z = jnp.fft.fftshift(z, axes=(-2, -1))
    out = jnp.stack([jnp.real(z), jnp.imag(z)], axis=2).astype(jnp.float32)
    return out.reshape(B, nc, 2, H * W)


# ------------------------------- Model blocks -------------------------------


def pack_cnn_params(layers):
    # (3, 3, Cin, Cout) weights -> (Cout, 9*Cin) bf16 matmul weights; bias -> (Cout, 1) f32
    packed = []
    for w, b in layers:
        _, _, cin, cout = w.shape
        w_mat = jnp.transpose(w.reshape(9, cin, cout), (2, 0, 1)).reshape(cout, 9 * cin)
        packed.append((w_mat.astype(jnp.bfloat16), b.reshape(cout, 1).astype(jnp.float32)))
    return packed


def cnn_layer_forward(x, packed_layers, H, W):
    # x: (B, 2, HW) -> (B, 2, HW); ReLU after all but the last conv
    h = x
    n = len(packed_layers)
    for li, (w_mat, b_col) in enumerate(packed_layers):
        h = conv3x3_same(h, w_mat, b_col, H, W, relu=(li < n - 1))
    return h


def dc_perform(x, k0, m, sens, v, H, W, shift):
    # dataConsistencyTerm.perform, minus the coil-reduce (fused downstream).
    # NOTE: the reference also returns SS = (c*c).sum(1), which vsnet.forward never
    #       consumes, so it is dropped here (dead work).
    e = expand_operator(x, sens)                           # (B, nc, 2, HW)
    k = _fft2c(e, H, W, inverse=False, shift=shift)
    out = dc_combine(k, k0, m, v)
    return _fft2c(out, H, W, inverse=True, shift=shift)    # per-coil images


def vsnet_forward(x, k, m, c, params, alfa=0.1, beta=0.1, shift=False):
    # x, k, c: (B, coils, H, W, 2); m: (B, coils, H, W) binary mask
    B, nc, H, W, _ = x.shape
    HW = H * W
    to_planes = lambda t: jnp.transpose(t, (0, 1, 4, 2, 3)).reshape(B, nc, 2, HW)
    x_c = to_planes(x)                        # multi-coil image
    k_c = to_planes(k)                        # sampled k-space
    s_c = to_planes(c)                        # coil sensitivities
    m_c = m.astype(jnp.float32).reshape(B, nc, 1, HW)

    # conv weights packed once, outside the cascade loop (hoisted)
    packed = [pack_cnn_params(layers) for layers in params]

    xi = reduce_operator(x_c, s_c)            # (B, 2, HW)
    for layers in packed:                     # one entry per cascade
        x_cnn = cnn_layer_forward(xi, layers, H, W)
        coil_img = dc_perform(xi, k_c, m_c, s_c, alfa, H, W, shift)
        xi = reduce_weighted_average(coil_img, s_c, xi, x_cnn, beta)
    return xi.reshape(B, 2, H, W)             # == x.permute(0, 3, 1, 2)


def init_params(key, cascades, hiddim):
    params = []
    dims = [(2, hiddim), (hiddim, hiddim), (hiddim, hiddim), (hiddim, hiddim), (hiddim, 2)]
    for _ in range(cascades):
        layers = []
        for (cin, cout) in dims:
            key, kw, kb = jax.random.split(key, 3)
            w = jax.random.normal(kw, (3, 3, cin, cout), jnp.float32) * 0.05
            b = jax.random.normal(kb, (cout,), jnp.float32) * 0.01
            layers.append((w, b))
        params.append(layers)
    return params


# ---------------------------------- demo -------------------------------------

if __name__ == "__main__":
    B, COILS, H, W = 2, 4, 16, 16
    HIDDIM, CASCADES = 32, 2
    key = jax.random.PRNGKey(0)
    kx, kk, km, kc, kp = jax.random.split(key, 5)

    x = jax.random.normal(kx, (B, COILS, H, W, 2), jnp.float32)
    k = jax.random.normal(kk, (B, COILS, H, W, 2), jnp.float32)
    m = (jax.random.uniform(km, (B, COILS, H, W)) > 0.5).astype(jnp.float32)
    c = jax.random.normal(kc, (B, COILS, H, W, 2), jnp.float32) * 0.5

    params = init_params(kp, cascades=CASCADES, hiddim=HIDDIM)

    out = vsnet_forward(x, k, m, c, params, alfa=0.1, beta=0.1, shift=False)
    out = jax.block_until_ready(out)
    assert out.shape == (B, 2, H, W), out.shape
    print("KERNEL_OK")
</pallas_src>

<mosaic_0001>
module attributes {stable_mosaic.version = 11 : i64} {
  func.func @_reduce_kernel(%arg0: i32, %arg1: i32, %arg2: memref<1x1x2x256xf32, #tpu.memory_space<vmem>>, %arg3: memref<1x1x2x256xf32, #tpu.memory_space<vmem>>, %arg4: memref<1x2x256xf32, #tpu.memory_space<vmem>>, %arg5: memref<2x256xf32, #tpu.memory_space<vmem>>) attributes {dimension_semantics = [#tpu.dimension_semantics<parallel>, #tpu.dimension_semantics<arbitrary>], iteration_bounds = array<i64: 2, 4>, scalar_prefetch = 0 : i64, scratch_operands = 1 : i64, tpu.core_type = #tpu.core_type<tc>, window_params = [{transform_indices = @transform_0, window_bounds = array<i64: 1, 1, 2, 256>}, {transform_indices = @transform_1, window_bounds = array<i64: 1, 1, 2, 256>}, {transform_indices = @transform_2, window_bounds = array<i64: 1, 2, 256>}]} {
    %c0_i32 = arith.constant 0 : i32
    %0 = arith.cmpi eq, %arg1, %c0_i32 : i32
    %1 = arith.extui %0 : i1 to i32
    %c0_i32_0 = arith.constant 0 : i32
    %2 = arith.cmpi ne, %1, %c0_i32_0 : i32
    scf.if %2 {
      %cst = arith.constant 0.000000e+00 : f32
      %26 = vector.broadcast %cst : f32 to vector<2x256xf32>
      %c0_16 = arith.constant 0 : index
      %c0_17 = arith.constant 0 : index
      %27 = vector.load %arg5[%c0_16, %c0_17] : memref<2x256xf32, #tpu.memory_space<vmem>>, vector<2x256xf32>
      tpu.vector_store %arg5[%c0_16, %c0_17], %26 {strides = array<i32>} : memref<2x256xf32, #tpu.memory_space<vmem>>, vector<2x256xf32>,
    } else {
    }
    %c0 = arith.constant 0 : index
    %c0_1 = arith.constant 0 : index
    %c0_2 = arith.constant 0 : index
    %c0_3 = arith.constant 0 : index
    %3 = vector.load %arg2[%c0, %c0_1, %c0_2, %c0_3] : memref<1x1x2x256xf32, #tpu.memory_space<vmem>>, vector<1x1x2x256xf32>
    %4 = vector.shape_cast %3 : vector<1x1x2x256xf32> to vector<2x256xf32>
    %c0_4 = arith.constant 0 : index
    %c0_5 = arith.constant 0 : index
    %c0_6 = arith.constant 0 : index
    %c0_7 = arith.constant 0 : index
    %5 = vector.load %arg3[%c0_4, %c0_5, %c0_6, %c0_7] : memref<1x1x2x256xf32, #tpu.memory_space<vmem>>, vector<1x1x2x256xf32>
    %6 = vector.shape_cast %5 : vector<1x1x2x256xf32> to vector<2x256xf32>
    %7 = vector.extract_strided_slice %4 {offsets = [0, 0], sizes = [1, 256], strides = [1, 1]} : vector<2x256xf32> to vector<1x256xf32>
    %8 = vector.extract_strided_slice %4 {offsets = [1, 0], sizes = [1, 256], strides = [1, 1]} : vector<2x256xf32> to vector<1x256xf32>
    %9 = vector.extract_strided_slice %6 {offsets = [0, 0], sizes = [1, 256], strides = [1, 1]} : vector<2x256xf32> to vector<1x256xf32>
    %10 = vector.extract_strided_slice %6 {offsets = [1, 0], sizes = [1, 256], strides = [1, 1]} : vector<2x256xf32> to vector<1x256xf32>
    %c0_8 = arith.constant 0 : index
    %c0_9 = arith.constant 0 : index
    %11 = vector.load %arg5[%c0_8, %c0_9] : memref<2x256xf32, #tpu.memory_space<vmem>>, vector<1x256xf32>
    %12 = arith.mulf %7, %9 : vector<1x256xf32>
    %13 = arith.mulf %8, %10 : vector<1x256xf32>
    %14 = arith.addf %12, %13 : vector<1x256xf32>
    %15 = arith.addf %11, %14 : vector<1x256xf32>
    %c0_10 = arith.constant 0 : index
    %c0_11 = arith.constant 0 : index
    %16 = vector.load %arg5[%c0_10, %c0_11] : memref<2x256xf32, #tpu.memory_space<vmem>>, vector<1x256xf32>
    tpu.vector_store %arg5[%c0_10, %c0_11], %15 {strides = array<i32>} : memref<2x256xf32, #tpu.memory_space<vmem>>, vector<1x256xf32>,
    %c1 = arith.constant 1 : index
    %c0_12 = arith.constant 0 : index
    %17 = vector.load %arg5[%c1, %c0_12] : memref<2x256xf32, #tpu.memory_space<vmem>>, vector<1x256xf32>
    %18 = arith.mulf %8, %9 : vector<1x256xf32>
    %19 = arith.mulf %7, %10 : vector<1x256xf32>
    %20 = arith.subf %18, %19 : vector<1x256xf32>
    %21 = arith.addf %17, %20 : vector<1x256xf32>
    %c1_13 = arith.constant 1 : index
    %c0_14 = arith.constant 0 : index
    %22 = vector.load %arg5[%c1_13, %c0_14] : memref<2x256xf32, #tpu.memory_space<vmem>>, vector<1x256xf32>
    tpu.vector_store %arg5[%c1_13, %c0_14], %21 {strides = array<i32>} : memref<2x256xf32, #tpu.memory_space<vmem>>, vector<1x256xf32>,
    %c3_i32 = arith.constant 3 : i32
    %23 = arith.cmpi eq, %arg1, %c3_i32 : i32
    %24 = arith.extui %23 : i1 to i32
    %c0_i32_15 = arith.constant 0 : i32
    %25 = arith.cmpi ne, %24, %c0_i32_15 : i32
    scf.if %25 {
      %c0_16 = arith.constant 0 : index
      %c0_17 = arith.constant 0 : index
      %26 = vector.load %arg5[%c0_16, %c0_17] : memref<2x256xf32, #tpu.memory_space<vmem>>, vector<2x256xf32>
      %c0_18 = arith.constant 0 : index
      %c0_19 = arith.constant 0 : index
      %c0_20 = arith.constant 0 : index
      %27 = vector.load %arg4[%c0_18, %c0_19, %c0_20] : memref<1x2x256xf32, #tpu.memory_space<vmem>>, vector<1x2x256xf32>
      %28 = vector.shape_cast %27 : vector<1x2x256xf32> to vector<2x256xf32>
      %29 = vector.shape_cast %26 : vector<2x256xf32> to vector<1x2x256xf32>
      tpu.vector_store %arg4[%c0_18, %c0_19, %c0_20], %29 {strides = array<i32>} : memref<1x2x256xf32, #tpu.memory_space<vmem>>, vector<1x2x256xf32>,
    } else {
    }
    return
  }
  func.func @transform_0(%arg0: i32, %arg1: i32) -> (i32, i32, i32, i32) {
    %c0_i32 = arith.constant 0 : i32
    %c0_i32_0 = arith.constant 0 : i32
    %c0_i32_1 = arith.constant 0 : i32
    return %arg0, %arg1, %c0_i32, %c0_i32_0 : i32, i32, i32, i32
  }
  func.func @transform_1(%arg0: i32, %arg1: i32) -> (i32, i32, i32, i32) {
    %c0_i32 = arith.constant 0 : i32
    %c0_i32_0 = arith.constant 0 : i32
    %c0_i32_1 = arith.constant 0 : i32
    return %arg0, %arg1, %c0_i32, %c0_i32_0 : i32, i32, i32, i32
  }
  func.func @transform_2(%arg0: i32, %arg1: i32) -> (i32, i32, i32) {
    %c0_i32 = arith.constant 0 : i32
    %c0_i32_0 = arith.constant 0 : i32
    %c0_i32_1 = arith.constant 0 : i32
    return %arg0, %c0_i32, %c0_i32_0 : i32, i32, i32
  }
}

</mosaic_0001>

<llo_original>
// kernel: tpu_custom_call.1
$region0: #{tpu_custom_call.1}
  #allocation0 [shape = 'u32[]', space=smem, size = 0x4, offset = 0x4, fixed_abs, tag = 'smem constant byte address 0x4 - core index']
  #allocation1 [shape = 'u32[144,128]{1,0:T(1,128)}', space=vmem, size = 0x12000, scoped, tag = 'internal scratch']
  #allocation2 [shape = 'f32[2,256]{1,0:T(2,128)}', space=vmem, size = 0x800, scoped, tag = 'scratch operand']
  %s0 = inlined_call_operand.hbm [shape: f32[2,4,2,256], index: 0, kind: input, shape index: {}]
  %s1 = inlined_call_operand.hbm [shape: f32[2,4,2,256], index: 1, kind: input, shape index: {}]
  %s2 = inlined_call_operand.hbm [shape: f32[2,2,256], index: 2, kind: output, shape index: {}]
  %s3 = sld [smem:[#allocation0]]
  $region57: #{tpu_custom_call.1} parent=0
    _
  %s5 = ssub.s32 1, %s3
  %s6 = scalar_select 0, %s5, %s3
  $region1: #{tpu_custom_call.1} parent=0
    #allocation3 [shape = 'u8[4096]{0}', space=vmem, size = 0x1000, scoped, tag = 'input window, operand 0']
    #allocation4 [shape = 's32[2]{0}', space=sflag, size = 0x8, scoped, tag = 'scoped memory for tpu_custom_call.1']
    #allocation5 [shape = 's32[2]{0}', space=sflag, size = 0x8, scoped, tag = 'scoped memory for tpu_custom_call.1']
    #allocation6 [shape = 'u8[4096]{0}', space=vmem, size = 0x1000, scoped, tag = 'input window, operand 1']
    #allocation7 [shape = 's32[2]{0}', space=sflag, size = 0x8, scoped, tag = 'scoped memory for tpu_custom_call.1']
    #allocation8 [shape = 'u8[4096]{0}', space=vmem, size = 0x1000, scoped, tag = 'output window, operand 0']
    %7 = vsyncpa [#allocation4], 0
    %s8 = scalar_lea.sflag [#allocation4], 1
    %9 = vsyncpa %s8, 0
    %10 = vsyncpa [#allocation7], 0
    %s11 = scalar_lea.sflag [#allocation7], 1
    %12 = vsyncpa %s11, 0
    %13 = vsyncpa [#allocation5], 0
    %s14 = scalar_lea.sflag [#allocation5], 1
    %15 = vsyncpa %s14, 0
    loop: start=0, step=1, limit=10
    $region2: #{tpu_custom_call.1} parent=1 // loop_pre_header
      _
    $region3: #{tpu_custom_call.1} parent=1 // loop_header
      %s17 = sphi 0, %s21
      %p18 = scmp.ge.s32.totalorder %s17, 10
      %s24 = sphi 0, %s36
      %s25 = sphi 0, %s32
      %s26 = sphi 0, %s24
      %s27 = sphi 0, %s25
      %s28 = sphi 0, %s26
      %s29 = sphi 0, %s27
      %s41 = sphi 0, %s43
      %s44 = sphi 0, %s41
      %s45 = sphi 0, %s44
      %s61 = sphi 0, %s45
      %s69 = sphi 0, %s71
      %s72 = sphi 0, %s69
      %s73 = sphi 0, %s72
      %s89 = sphi 0, %s73
      %s95 = sphi 0, %s97
      %s98 = sphi 0, %s95
      %s99 = sphi 0, %s98
      %s115 = sphi 0, %s99
    $region4: #{tpu_custom_call.1} parent=1 // loop_header_branch
      %20 = sbr.rel (%p18) target = $region8
    $region5: #{tpu_custom_call.1} parent=1 // loop_body
      %s22 = ssub.s32 %s17, 1
      %s23 = ssub.s32 %s17, 2
      %s30 = sadd.s32 1, %s25
      %p31 = scmp.ge.s32.totalorder %s30, 4
      %s32 = scalar_select %p31, 0, %s30
      %s33 = sadd.s32 1, %s24
      %s34 = scalar_select %p31, %s33, %s24
      %p35 = scmp.ge.s32.totalorder %s34, 2
      %s36 = scalar_select %p35, 0, %s34
      %s37 = ssub.s32 %s24, %s36
      %s38 = ssub.s32 %s25, %s32
      %s39 = sor.u32 %s37, %s38
      %p40 = scmp.eq.s32.totalorder %s39, 0
      %s42 = sadd.s32 %s41, 1
      %s43 = scalar_select %p40, %s41, %s42
      %p46 = pneg %p40
      %p47 = scmp.eq.s32.totalorder %s17, 7
      %p48 = por %p46, %p47
      %p49 = scmp.ne.s32.totalorder %s41, %s44
      %p50 = scmp.eq.s32.totalorder %s17, 0
      %p51 = por %p49, %p50
      %p52 = scmp.ne.s32.totalorder %s41, %s44
      %p53 = scmp.eq.s32.totalorder %s22, 7
      %p54 = por %p52, %p53
      %p55 = scmp.ne.s32.totalorder %s44, %s45
      %p56 = scmp.eq.s32.totalorder %s22, 0
      %p57 = por %p55, %p56
      %p58 = scmp.ne.s32.totalorder %s44, %s45
      %p59 = scmp.eq.s32.totalorder %s23, 7
      %p60 = por %p58, %p59
      %p62 = scmp.ne.s32.totalorder %s45, %s61
      %p63 = scmp.eq.s32.totalorder %s23, 0
      %p64 = por %p62, %p63
      %s65 = ssub.s32 %s24, %s36
      %s66 = ssub.s32 %s25, %s32
      %s67 = sor.u32 %s65, %s66
      %p68 = scmp.eq.s32.totalorder %s67, 0
      %s70 = sadd.s32 %s69, 1
      %s71 = scalar_select %p68, %s69, %s70
      %p74 = pneg %p68
      %p75 = scmp.eq.s32.totalorder %s17, 7
      %p76 = por %p74, %p75
      %p77 = scmp.ne.s32.totalorder %s69, %s72
      %p78 = scmp.eq.s32.totalorder %s17, 0
      %p79 = por %p77, %p78
      %p80 = scmp.ne.s32.totalorder %s69, %s72
      %p81 = scmp.eq.s32.totalorder %s22, 7
      %p82 = por %p80, %p81
      %p83 = scmp.ne.s32.totalorder %s72, %s73
      %p84 = scmp.eq.s32.totalorder %s22, 0
      %p85 = por %p83, %p84
      %p86 = scmp.ne.s32.totalorder %s72, %s73
      %p87 = scmp.eq.s32.totalorder %s23, 7
      %p88 = por %p86, %p87
      %p90 = scmp.ne.s32.totalorder %s73, %s89
      %p91 = scmp.eq.s32.totalorder %s23, 0
      %p92 = por %p90, %p91
      %s93 = ssub.s32 %s24, %s36
      %p94 = scmp.eq.s32.totalorder %s93, 0
      %s96 = sadd.s32 %s95, 1
      %s97 = scalar_select %p94, %s95, %s96
      %p100 = pneg %p94
      %p101 = scmp.eq.s32.totalorder %s17, 7
      %p102 = por %p100, %p101
      %p103 = scmp.ne.s32.totalorder %s95, %s98
      %p104 = scmp.eq.s32.totalorder %s17, 0
      %p105 = por %p103, %p104
      %p106 = scmp.ne.s32.totalorder %s95, %s98
      %p107 = scmp.eq.s32.totalorder %s22, 7
      %p108 = por %p106, %p107
      %p109 = scmp.ne.s32.totalorder %s98, %s99
      %p110 = scmp.eq.s32.totalorder %s22, 0
      %p111 = por %p109, %p110
      %p112 = scmp.ne.s32.totalorder %s98, %s99
      %p113 = scmp.eq.s32.totalorder %s23, 7
      %p114 = por %p112, %p113
      %p116 = scmp.ne.s32.totalorder %s99, %s115
      %p117 = scmp.eq.s32.totalorder %s23, 0
      %p118 = por %p116, %p117
      %p119 = scmp.le.s32.totalorder 1, %s17
      %p120 = scmp.lt.s32.totalorder %s17, 9
      %p121 = pnand %p119, %p120
      %p122 = pneg %p121
      // Predicated region
      $region9: #{tpu_custom_call.1} parent=5 // pred_check
        _
      $region10: #{tpu_custom_call.1} parent=5 // pred_check_branch
        %124 = sbr.rel (%p121) target = $region12
      $region11: #{tpu_custom_call.1} parent=5 // pred_region
        %s125 = ssub.s32 %s17, 1
      $region12: #{tpu_custom_call.1} parent=5 // pred_fallthru
        _
      %p126 = scmp.lt.s32.totalorder %s17, 8
      // Predicated region
      $region13: #{tpu_custom_call.1} parent=5 // pred_check
        %p127 = pneg %p126
      $region14: #{tpu_custom_call.1} parent=5 // pred_check_branch
        %129 = sbr.rel (%p127) target = $region16
      $region15: #{tpu_custom_call.1} parent=5 // pred_region
        // Predicated region
        $region17: #{tpu_custom_call.1} parent=15 // pred_check
          %p130 = pneg %p51
        $region18: #{tpu_custom_call.1} parent=15 // pred_check_branch
          %132 = sbr.rel (%p130) target = $region20
        $region19: #{tpu_custom_call.1} parent=15 // pred_region
          %s133 = sand.u32 %s41, 1
          %s134 = scalar_lea.sflag [#allocation4], %s133
          %s135 = sand.u32 %s41, 1
          %s136 = smul.addr %s135, 4
          %s137 = scalar_lea.vmem [#allocation3], %s136
          %s139 = ssub.s32 64, 64
          %140 = vsyncadd %s134, %s139
          %s141 = smul.addr %s25, 2
          %s142 = smul.addr %s24, 8
          %s143 = sadd.s32 %s141, %s142
          %s144 = smul.addr %s143, 32
          %s145 = scalar_lea.hbm %s0, %s144
          %s147 = sshll.u32 %s137, 4
          %s148 = int_to_ptr.vmem [resolvable:$true] %s147
          %150 = dma.hbm_to_vmem [thread:$0]  %s145, 64, %s148, %s134
        $region20: #{tpu_custom_call.1} parent=15 // pred_fallthru
          _
        // Predicated region
        $region21: #{tpu_custom_call.1} parent=15 // pred_check
          %p151 = pneg %p79
        $region22: #{tpu_custom_call.1} parent=15 // pred_check_branch
          %153 = sbr.rel (%p151) target = $region24
        $region23: #{tpu_custom_call.1} parent=15 // pred_region
          %s154 = sand.u32 %s69, 1
          %s155 = scalar_lea.sflag [#allocation7], %s154
          %s156 = sand.u32 %s69, 1
          %s157 = smul.addr %s156, 4
          %s158 = scalar_lea.vmem [#allocation6], %s157
          %s160 = ssub.s32 64, 64
          %161 = vsyncadd %s155, %s160
          %s162 = smul.addr %s25, 2
          %s163 = smul.addr %s24, 8
          %s164 = sadd.s32 %s162, %s163
          %s165 = smul.addr %s164, 32
          %s166 = scalar_lea.hbm %s1, %s165
          %s168 = sshll.u32 %s158, 4
          %s169 = int_to_ptr.vmem [resolvable:$true] %s168
          %171 = dma.hbm_to_vmem [thread:$0]  %s166, 64, %s169, %s155
        $region24: #{tpu_custom_call.1} parent=15 // pred_fallthru
          _
      $region16: #{tpu_custom_call.1} parent=5 // pred_fallthru
        _
      %p172 = scmp.le.s32.totalorder 1, %s17
      %p173 = scmp.lt.s32.totalorder %s17, 9
      %p174 = pnand %p172, %p173
      %p175 = pneg %p174
      // Predicated region
      $region25: #{tpu_custom_call.1} parent=5 // pred_check
        _
      $region26: #{tpu_custom_call.1} parent=5 // pred_check_branch
        %177 = sbr.rel (%p174) target = $region28
      $region27: #{tpu_custom_call.1} parent=5 // pred_region
        %s178 = ssub.s32 %s17, 1
        %s179 = sand.u32 %s44, 1
        %s180 = scalar_lea.sflag [#allocation4], %s179
        %s181 = sand.u32 %s44, 1
        %s182 = smul.addr %s181, 4
        %s183 = scalar_lea.vmem [#allocation3], %s182
        // Predicated region
        $region29: #{tpu_custom_call.1} parent=27 // pred_check
          %p184 = pneg %p57
        $region30: #{tpu_custom_call.1} parent=27 // pred_check_branch
          %186 = sbr.rel (%p184) target = $region32
        $region31: #{tpu_custom_call.1} parent=27 // pred_region
          %187 = dma.done %s180, 64
        $region32: #{tpu_custom_call.1} parent=27 // pred_fallthru
          _
        %s188 = sand.u32 %s72, 1
        %s189 = scalar_lea.sflag [#allocation7], %s188
        %s190 = sand.u32 %s72, 1
        %s191 = smul.addr %s190, 4
        %s192 = scalar_lea.vmem [#allocation6], %s191
        // Predicated region
        $region33: #{tpu_custom_call.1} parent=27 // pred_check
          %p193 = pneg %p85
        $region34: #{tpu_custom_call.1} parent=27 // pred_check_branch
          %195 = sbr.rel (%p193) target = $region36
        $region35: #{tpu_custom_call.1} parent=27 // pred_region
          %196 = dma.done %s189, 64
        $region36: #{tpu_custom_call.1} parent=27 // pred_fallthru
          _
        %s197 = sand.u32 %s44, 1
        %s198 = scalar_lea.sflag [#allocation4], %s197
        %s199 = sand.u32 %s44, 1
        %s200 = smul.addr %s199, 4
        %s201 = scalar_lea.vmem [#allocation3], %s200
        %p202 = pneg %p57
        %p203 = pneg %p54
        %s204 = sand.u32 %s72, 1
        %s205 = scalar_lea.sflag [#allocation7], %s204
        %s206 = sand.u32 %s72, 1
        %s207 = smul.addr %s206, 4
        %s208 = scalar_lea.vmem [#allocation6], %s207
        %p209 = pneg %p85
        %p210 = pneg %p82
        %p211 = pneg %p111
        %p212 = pneg %p108
        %s213 = sand.u32 %s98, 1
        %s214 = scalar_lea.sflag [#allocation5], %s213
        %s215 = sand.u32 %s98, 1
        %s216 = smul.addr %s215, 4
        %s217 = scalar_lea.vmem [#allocation8], %s216
        %p218 = scmp.eq.s32.totalorder %s27, 0
        // Predicated region
        $region37: #{tpu_custom_call.1} parent=27 // pred_check
          %p219 = pneg %p218
        $region38: #{tpu_custom_call.1} parent=27 // pred_check_branch
          %221 = sbr.rel (%p219) target = $region40
        $region39: #{tpu_custom_call.1} parent=27 // pred_region
          %222 = vst [vmem:[#allocation2] sm:$0xf] 0.0
        $region40: #{tpu_custom_call.1} parent=27 // pred_fallthru
          _
        %v223 = vld [vmem:[%s183] sm:$0xf]
        %v224 = vld [vmem:[%s192] sm:$0xf]
        %v225 = vld [vmem:[#allocation2] ss:$2 sm:$0x3]
        %v226 = vmul.f32 %v223, %v224
        %v228 = vrot.slane %v226, 7
        %v229 = vrot.slane %v228, 2
        %v231 = vadd.f32 %v226, %v229
        %v234 = vunpack.c.l.s4 1966171168
        %v235 = vunpack.c.0.s8 %v234
        %v236 = vlaneseq
        %v237 = vshrl.u32 %v236, 7
        %v238 = vsub.s32 %v235, %v237
        %v239 = vrot.slane %v231, %v238
        %v241 = vadd.f32 %v225, %v239
        %v242 = vlaneseq
        %vm243 = vcmp.ge.s32.totalorder %v242, 0
        %vm244 = vcmp.lt.s32.totalorder %v242, 256
        %vm245 = vmand %vm243, %vm244
        %246 = vst.msk [vmem:[#allocation2] ss:$2 sm:$0x3] %vm245, %v241
        %s247 = scalar_lea.vmem [#allocation2], 1
        %v248 = vld [vmem:[%s247] ss:$2 sm:$0x3]
        %v250 = vrot.slane %v224, 7
        %v252 = vmul.f32 %v223, %v250
        %v253 = vrot.slane %v250, 2
        %v255 = vmul.f32 %v223, %v253
        %v257 = vrot.slane %v255, 7
        %v259 = vsub.f32 %v252, %v257
        %v262 = vunpack.c.l.s4 1966171168
        %v263 = vunpack.c.0.s8 %v262
        %v264 = vlaneseq
        %v265 = vshrl.u32 %v264, 7
        %v266 = vsub.s32 %v263, %v265
        %v267 = vrot.slane %v259, %v266
        %v268 = vcombine.high %v267, %v267
        %v270 = vadd.f32 %v248, %v268
        %271 = vst.msk [vmem:[%s247] ss:$2 sm:$0x3] %vm245, %v270
        %p272 = scmp.eq.s32.totalorder %s27, 3
        // Predicated region
        $region41: #{tpu_custom_call.1} parent=27 // pred_check
          %p273 = pneg %p272
        $region42: #{tpu_custom_call.1} parent=27 // pred_check_branch
          %275 = sbr.rel (%p273) target = $region44
        $region43: #{tpu_custom_call.1} parent=27 // pred_region
          %v276 = vld [vmem:[#allocation2] sm:$0xf]
          %277 = vst [vmem:[%s217] sm:$0xf] %v276
        $region44: #{tpu_custom_call.1} parent=27 // pred_fallthru
          _
        %s278 = sand.u32 %s98, 1
        %s279 = scalar_lea.sflag [#allocation5], %s278
        %s280 = sand.u32 %s98, 1
        %s281 = smul.addr %s280, 4
        %s282 = scalar_lea.vmem [#allocation8], %s281
        // Predicated region
        $region45: #{tpu_custom_call.1} parent=27 // pred_check
          %p283 = pneg %p108
        $region46: #{tpu_custom_call.1} parent=27 // pred_check_branch
          %285 = sbr.rel (%p283) target = $region48
        $region47: #{tpu_custom_call.1} parent=27 // pred_region
          %s287 = ssub.s32 64, 64
          %288 = vsyncadd %s279, %s287
          %s289 = smul.addr %s26, 2
          %s290 = smul.addr %s289, 32
          %s291 = scalar_lea.hbm %s2, %s290
          %s293 = sshll.u32 %s282, 4
          %s294 = int_to_ptr.vmem [resolvable:$true] %s293
          %296 = dma.vmem_to_hbm [thread:$0]  %s294, 64, %s291, %s279
        $region48: #{tpu_custom_call.1} parent=27 // pred_fallthru
          _
      $region28: #{tpu_custom_call.1} parent=5 // pred_fallthru
        _
      %p297 = scmp.le.s32.totalorder 2, %s17
      // Predicated region
      $region49: #{tpu_custom_call.1} parent=5 // pred_check
        %p298 = pneg %p297
      $region50: #{tpu_custom_call.1} parent=5 // pred_check_branch
        %300 = sbr.rel (%p298) target = $region52
      $region51: #{tpu_custom_call.1} parent=5 // pred_region
        %s301 = ssub.s32 %s17, 2
        // Predicated region
        $region53: #{tpu_custom_call.1} parent=51 // pred_check
          %p302 = pneg %p114
        $region54: #{tpu_custom_call.1} parent=51 // pred_check_branch
          %304 = sbr.rel (%p302) target = $region56
        $region55: #{tpu_custom_call.1} parent=51 // pred_region
          %s305 = sand.u32 %s99, 1
          %s306 = scalar_lea.sflag [#allocation5], %s305
          %s307 = sand.u32 %s99, 1
          %s308 = smul.addr %s307, 4
          %s309 = scalar_lea.vmem [#allocation8], %s308
          %310 = dma.done %s306, 64
        $region56: #{tpu_custom_call.1} parent=51 // pred_fallthru
          _
      $region52: #{tpu_custom_call.1} parent=5 // pred_fallthru
        _
    $region6: #{tpu_custom_call.1} parent=1 // loop_footer
      %s21 = sadd.s32 1, %s17
    $region7: #{tpu_custom_call.1} parent=1 // loop_footer_branch
      %16 = sbr.rel target = $region3
    $region8: #{tpu_custom_call.1} parent=1 // loop_exit
      _
    %311 = vsyncpa [#allocation4], 1
    %s312 = scalar_lea.sflag [#allocation4], 1
    %313 = vsyncpa %s312, 1
    %314 = vsyncpa [#allocation7], 1
    %s315 = scalar_lea.sflag [#allocation7], 1
    %316 = vsyncpa %s315, 1
    %317 = vsyncpa [#allocation5], 1
    %s318 = scalar_lea.sflag [#allocation5], 1
    %319 = vsyncpa %s318, 1

</llo_original>
